<compile_context>
chip_gen: v5e
topology: v5e:2x2
jax: 0.10.0
libtpu: 0.0.40
codegen_flags: <defaults>
</compile_context>

<pallas_src>
import functools

import jax
import jax.numpy as jnp
from jax.experimental import pallas as pl
from jax.experimental.pallas import tpu as pltpu


def _local_crf2_kernel(f_ref, l_ref, c_ref, compat_ref, bias_ref, out_ref,
                       *, C, Ncls, H, W, klen, r):
    del klen
    HW = H * W
    f = f_ref[0]                                   # (C, HW)     lane-dense
    logits = l_ref[0]                              # (Ncls, HW)
    c = c_ref[...]                                 # (1, HW)  coord code y*2W + x

    # ---- softmax over the class (sublane) axis; EUP reciprocal ----------------
    m = jnp.max(logits, axis=0, keepdims=True)
    e = jnp.exp(logits - m)
    q = e * pl.reciprocal(jnp.sum(e, axis=0, keepdims=True), approx=True)

    # ---- factorized squared-distance pieces -----------------------------------
    s_sq = jnp.sum(f * f, axis=0, keepdims=True)   # (1, HW)
    inv_c = 1.0 / C

    # Payloads that each ride a single roll (<= 8 sublane rows -> same vregs):
    #   src : features + ||f||^2            -> sn - 2<f, fn> via one reduce vs wmul
    #   qc  : softmax(Q) + coordinate code  -> neighbour Q and in-bounds mask
    src = jnp.concatenate([f, s_sq], axis=0)                           # (C+1, HW)
    wmul = jnp.concatenate([-2.0 * f, jnp.ones((1, HW), jnp.float32)], axis=0)
    qc = jnp.concatenate([q, c], axis=0)                               # (Ncls+1, HW)

    # In-bounds mask from the rolled coordinate code.  c = y*K + x with K = 2W,
    # so row/col deltas decode exactly and reject the row / image wraps of the
    # circular roll (needs H > klen and W > klen).  Because the mask comes from
    # coordinates rolled together with the data, the result does not depend on
    # the roll-direction convention.
    Kf = float(2 * W)
    inv_k = 1.0 / Kf
    row_bias = float(W) - 0.5
    rf = float(r)

    def in_bounds(cn):
        delta = cn - c                                   # (1, HW)
        dyn = jnp.floor((delta + row_bias) * inv_k)      # exact row delta
        dxn = delta - dyn * Kf                           # exact col delta
        return (jnp.abs(dyn) <= rf) & (jnp.abs(dxn) <= rf)

    # ---- window accumulation ---------------------------------------------------
    # Centre tap: diff == 0, aff == 1, always in bounds.
    accum = q                                                           # (Ncls, HW)

    # TODO(synk): for klen >= 5 replace this static unroll over offset pairs by
    # a lax.fori_loop (unroll=True for small klen) to bound vreg live ranges.
    for dyo in range(0, r + 1):
        for dxo in range(-r, r + 1):
            if dyo == 0 and dxo <= 0:
                continue                     # (0,0) is the centre; dxo<0 mirrors
            off = dyo * W + dxo              # flat neighbour offset, > 0
            shift_p = HW - off               # direct member of the +/- pair
            shift_m = off                    # mirrored member

            # --- direct offset --------------------------------------------------
            srcn = pltpu.roll(src, shift_p, axis=1)       # (C+1, HW)
            qcn = pltpu.roll(qc, shift_p, axis=1)         # (Ncls+1, HW)
            qn_p = qcn[:Ncls]
            cn_p = qcn[Ncls:Ncls + 1]

            t = jnp.sum(wmul * srcn, axis=0, keepdims=True)          # sn - 2<f,fn>
            diff = jnp.maximum((s_sq + t) * inv_c, 0.0)
            aff = jnp.exp(-diff)                                     # (1, HW)  EUP
            accum = accum + jnp.where(in_bounds(cn_p), aff, 0.0) * qn_p

            # --- mirrored offset: affinity is symmetric, reuse it with a roll ---
            qcm = pltpu.roll(qc, shift_m, axis=1)         # (Ncls+1, HW)
            qn_m = qcm[:Ncls]
            cn_m = qcm[Ncls:Ncls + 1]
            aff_m = pltpu.roll(aff, shift_m, axis=1)      # (1, HW)
            accum = accum + jnp.where(in_bounds(cn_m), aff_m, 0.0) * qn_m

    # ---- 1x1 compatibility mix on the MXU: (Ncls,Ncls) @ (Ncls,HW) -------------
    # compat_ref already holds sigmoid(compatibility) * weight / klen.
    mixed = jnp.dot(compat_ref[...], accum, preferred_element_type=jnp.float32)

    # ---- output_U = input_logit - (mix + bias): one lane-dense slab store ------
    out_ref[0] = logits - (mixed + bias_ref[...])


def local_crf2_forward(input_F, input_logit, kernel_len, weight, compatibility, bias):
    B, C, H, W = input_F.shape
    Ncls = input_logit.shape[1]
    assert compatibility.shape == (Ncls, Ncls, 1, 1)
    assert kernel_len % 2 == 1, "odd local window expected"
    # Load-bearing: the circular-roll wrap rejection needs H, W > kernel_len.
    assert H > kernel_len and W > kernel_len
    r = (kernel_len - 1) // 2
    HW = H * W
    # TODO(synk): generalize to H*W not a multiple of 128 by padding the flat
    # axis with out-of-range sentinel coordinates.
    assert HW % 128 == 0, "lane-dense layout expects H*W to be a multiple of 128"

    # Free reshapes only -- no padded copies are written to HBM.
    f2d = input_F.astype(jnp.float32).reshape(B, C, HW)
    l2d = input_logit.astype(jnp.float32).reshape(B, Ncls, HW)

    # Packed pixel coordinate code c = y*(2W) + x (exact in f32), one plane
    # shared by every image.
    yy = jnp.repeat(jnp.arange(H, dtype=jnp.float32), W)
    xx = jnp.tile(jnp.arange(W, dtype=jnp.float32), H)
    coord = (yy * float(2 * W) + xx).reshape(1, HW)

    # Fold sigmoid + weight + 1/klen scaling into the (Ncls, Ncls) mixing matrix.
    compat_scaled = (jax.nn.sigmoid(compatibility.astype(jnp.float32)).reshape(Ncls, Ncls)
                     * (jnp.asarray(weight, jnp.float32) / kernel_len))
    bias2d = jnp.asarray(bias, jnp.float32).reshape(Ncls, 1)

    kernel = functools.partial(_local_crf2_kernel, C=C, Ncls=Ncls, H=H, W=W,
                               klen=kernel_len, r=r)

    # TODO(synk): on single-TC chips (v5e/v6e) pack G images per grid step
    # (reshape to (B//G, C, G*HW)) to amortize per-step pipeline overhead; the
    # coordinate mask already rejects cross-image wraps.  Keep >= 2 grid steps
    # on v7x so both TensorCores stay busy.
    grid_spec = pltpu.PrefetchScalarGridSpec(
        num_scalar_prefetch=0,
        grid=(B,),
        in_specs=[
            pl.BlockSpec((1, C, HW), lambda b: (b, 0, 0)),       # features
            pl.BlockSpec((1, Ncls, HW), lambda b: (b, 0, 0)),    # logits
            pl.BlockSpec((1, HW), lambda b: (0, 0)),             # coord code
            pl.BlockSpec((Ncls, Ncls), lambda b: (0, 0)),        # sigmoid(compat)*w/klen
            pl.BlockSpec((Ncls, 1), lambda b: (0, 0)),           # bias
        ],
        out_specs=pl.BlockSpec((1, Ncls, HW), lambda b: (b, 0, 0)),
    )

    out2d = pl.pallas_call(
        kernel,
        out_shape=jax.ShapeDtypeStruct((B, Ncls, HW), jnp.float32),
        grid_spec=grid_spec,
        compiler_params=pltpu.CompilerParams(
            dimension_semantics=("parallel",),          # batch across TCs (v7x)
            vmem_limit_bytes=32 * 1024 * 1024,
        ),
    )(f2d, l2d, coord, compat_scaled, bias2d)

    return out2d.reshape(B, Ncls, H, W)


def local_crf2_reference(input_F, input_logit, kernel_len, weight, compatibility, bias):
    """Pure-JAX reference for validation."""
    B, C, H, W = input_F.shape
    Ncls = input_logit.shape[1]
    r = (kernel_len - 1) // 2
    Q = jax.nn.softmax(input_logit, axis=1)
    pad = ((0, 0), (0, 0), (r, r), (r, r))
    Fp = jnp.pad(input_F, pad)
    Qp = jnp.pad(Q, pad)
    msg = jnp.zeros((B, Ncls, H, W), jnp.float32)
    for dy in range(kernel_len):
        for dx in range(kernel_len):
            fn = Fp[:, :, dy:dy + H, dx:dx + W]
            diff = jnp.sum((input_F - fn) ** 2, axis=1) / C
            aff = weight * jnp.exp(-diff)
            qn = Qp[:, :, dy:dy + H, dx:dx + W]
            msg = msg + aff[:, None] * qn
    msg = msg / kernel_len
    cs = jax.nn.sigmoid(compatibility)[:, :, 0, 0]
    mixed = jnp.einsum("oi,bihw->bohw", cs, msg) + bias[None, :, None, None]
    return input_logit - mixed


if __name__ == "__main__":
    key = jax.random.PRNGKey(0)
    k1, k2, k3, k4 = jax.random.split(key, 4)

    B, C, H, W = 2, 6, 16, 16
    num_category = 4
    kernel_len = 3

    input_F = jax.random.normal(k1, (B, C, H, W), jnp.float32)
    input_logit = jax.random.normal(k2, (B, num_category, H, W), jnp.float32)

    # Parameters with the module's __init__ shapes.  Small deterministic random
    # values (instead of the all-zero reset) so the compatibility/bias paths are
    # exercised non-trivially; weight keeps its 1.0 init.
    weight = jnp.float32(1.0)
    compatibility = 0.1 * jax.random.normal(
        k3, (num_category, num_category, 1, 1), jnp.float32)
    bias = 0.1 * jax.random.normal(k4, (num_category,), jnp.float32)

    out = local_crf2_forward(input_F, input_logit, kernel_len,
                             weight, compatibility, bias)
    out = jax.block_until_ready(out)

    ref = local_crf2_reference(input_F, input_logit, kernel_len,
                               weight, compatibility, bias)
    assert out.shape == (B, num_category, H, W)
    # Tolerance leaves headroom for the approximate (EUP) softmax reciprocal and
    # MXU f32 rounding in the compatibility mix.
    assert jnp.allclose(out, ref, atol=5e-3, rtol=5e-3), "mismatch vs reference"
    print("KERNEL_OK")
</pallas_src>

<mosaic_0001>
module attributes {stable_mosaic.version = 11 : i64} {
  func.func @_local_crf2_kernel(%arg0: i32, %arg1: memref<1x6x256xf32, #tpu.memory_space<vmem>>, %arg2: memref<1x4x256xf32, #tpu.memory_space<vmem>>, %arg3: memref<1x256xf32, #tpu.memory_space<vmem>>, %arg4: memref<4x4xf32, #tpu.memory_space<vmem>>, %arg5: memref<4x1xf32, #tpu.memory_space<vmem>>, %arg6: memref<1x4x256xf32, #tpu.memory_space<vmem>>) attributes {dimension_semantics = [#tpu.dimension_semantics<parallel>], iteration_bounds = array<i64: 2>, scalar_prefetch = 0 : i64, scratch_operands = 0 : i64, tpu.core_type = #tpu.core_type<tc>, window_params = [{transform_indices = @transform_0, window_bounds = array<i64: 1, 6, 256>}, {transform_indices = @transform_1, window_bounds = array<i64: 1, 4, 256>}, {pipeline_mode = #tpu.pipeline_mode<synchronous>, transform_indices = @transform_2, window_bounds = array<i64: 1, 256>}, {pipeline_mode = #tpu.pipeline_mode<synchronous>, transform_indices = @transform_3, window_bounds = array<i64: 4, 4>}, {pipeline_mode = #tpu.pipeline_mode<synchronous>, transform_indices = @transform_4, window_bounds = array<i64: 4, 1>}, {transform_indices = @transform_5, window_bounds = array<i64: 1, 4, 256>}]} {
    %c0 = arith.constant 0 : index
    %c0_0 = arith.constant 0 : index
    %c0_1 = arith.constant 0 : index
    %0 = vector.load %arg1[%c0, %c0_0, %c0_1] : memref<1x6x256xf32, #tpu.memory_space<vmem>>, vector<1x6x256xf32>
    %1 = vector.shape_cast %0 : vector<1x6x256xf32> to vector<6x256xf32>
    %c0_2 = arith.constant 0 : index
    %c0_3 = arith.constant 0 : index
    %c0_4 = arith.constant 0 : index
    %2 = vector.load %arg2[%c0_2, %c0_3, %c0_4] : memref<1x4x256xf32, #tpu.memory_space<vmem>>, vector<1x4x256xf32>
    %3 = vector.shape_cast %2 : vector<1x4x256xf32> to vector<4x256xf32>
    %c0_5 = arith.constant 0 : index
    %c0_6 = arith.constant 0 : index
    %4 = vector.load %arg3[%c0_5, %c0_6] : memref<1x256xf32, #tpu.memory_space<vmem>>, vector<1x256xf32>
    %cst = arith.constant dense<0xFF800000> : vector<256xf32>
    %5 = vector.multi_reduction <maximumf>, %3, %cst [0] : vector<4x256xf32> to vector<256xf32>
    %6 = vector.shape_cast %5 : vector<256xf32> to vector<1x256xf32>
    %7 = vector.broadcast %6 : vector<1x256xf32> to vector<4x256xf32>
    %8 = arith.subf %3, %7 : vector<4x256xf32>
    %9 = math.exp %8 : vector<4x256xf32>
    %cst_7 = arith.constant dense<0.000000e+00> : vector<256xf32>
    %10 = vector.multi_reduction <add>, %9, %cst_7 [0] : vector<4x256xf32> to vector<256xf32>
    %11 = vector.shape_cast %10 : vector<256xf32> to vector<1x256xf32>
    %12 = tpu.reciprocal %11 {approx = true} : vector<1x256xf32> -> vector<1x256xf32>
    %13 = vector.broadcast %12 : vector<1x256xf32> to vector<4x256xf32>
    %14 = arith.mulf %9, %13 : vector<4x256xf32>
    %15 = arith.mulf %1, %1 : vector<6x256xf32>
    %cst_8 = arith.constant dense<0.000000e+00> : vector<256xf32>
    %16 = vector.multi_reduction <add>, %15, %cst_8 [0] : vector<6x256xf32> to vector<256xf32>
    %17 = vector.shape_cast %16 : vector<256xf32> to vector<1x256xf32>
    %18 = tpu.concatenate %1, %17 in 0 : vector<6x256xf32>, vector<1x256xf32> -> vector<7x256xf32>
    %cst_9 = arith.constant -2.000000e+00 : f32
    %19 = vector.broadcast %cst_9 : f32 to vector<6x256xf32>
    %20 = arith.mulf %19, %1 : vector<6x256xf32>
    %cst_10 = arith.constant 1.000000e+00 : f32
    %21 = vector.broadcast %cst_10 : f32 to vector<1x256xf32>
    %22 = tpu.concatenate %20, %21 in 0 : vector<6x256xf32>, vector<1x256xf32> -> vector<7x256xf32>
    %23 = tpu.concatenate %14, %4 in 0 : vector<4x256xf32>, vector<1x256xf32> -> vector<5x256xf32>
    %c255_i32 = arith.constant 255 : i32
    %24 = tpu.dynamic_rotate %18 by %c255_i32 dim 1 : vector<7x256xf32>, i32 -> vector<7x256xf32>
    %c255_i32_11 = arith.constant 255 : i32
    %25 = tpu.dynamic_rotate %23 by %c255_i32_11 dim 1 : vector<5x256xf32>, i32 -> vector<5x256xf32>
    %26 = vector.extract_strided_slice %25 {offsets = [0, 0], sizes = [4, 256], strides = [1, 1]} : vector<5x256xf32> to vector<4x256xf32>
    %27 = vector.extract_strided_slice %25 {offsets = [4, 0], sizes = [1, 256], strides = [1, 1]} : vector<5x256xf32> to vector<1x256xf32>
    %28 = arith.mulf %22, %24 : vector<7x256xf32>
    %cst_12 = arith.constant dense<0.000000e+00> : vector<256xf32>
    %29 = vector.multi_reduction <add>, %28, %cst_12 [0] : vector<7x256xf32> to vector<256xf32>
    %30 = vector.shape_cast %29 : vector<256xf32> to vector<1x256xf32>
    %31 = arith.addf %17, %30 : vector<1x256xf32>
    %cst_13 = arith.constant 0.166666672 : f32
    %32 = vector.broadcast %cst_13 : f32 to vector<1x256xf32>
    %33 = arith.mulf %31, %32 : vector<1x256xf32>
    %cst_14 = arith.constant 0.000000e+00 : f32
    %34 = vector.broadcast %cst_14 : f32 to vector<1x256xf32>
    %35 = arith.maximumf %33, %34 : vector<1x256xf32>
    %cst_15 = arith.constant 0.000000e+00 : f32
    %36 = vector.broadcast %cst_15 : f32 to vector<1x256xf32>
    %37 = arith.subf %36, %35 : vector<1x256xf32>
    %38 = math.exp %37 : vector<1x256xf32>
    %39 = arith.subf %27, %4 : vector<1x256xf32>
    %cst_16 = arith.constant 1.550000e+01 : f32
    %40 = vector.broadcast %cst_16 : f32 to vector<1x256xf32>
    %41 = arith.addf %39, %40 : vector<1x256xf32>
    %cst_17 = arith.constant 3.125000e-02 : f32
    %42 = vector.broadcast %cst_17 : f32 to vector<1x256xf32>
    %43 = arith.mulf %41, %42 : vector<1x256xf32>
    %44 = math.floor %43 : vector<1x256xf32>
    %cst_18 = arith.constant 3.200000e+01 : f32
    %45 = vector.broadcast %cst_18 : f32 to vector<1x256xf32>
    %46 = arith.mulf %44, %45 : vector<1x256xf32>
    %47 = arith.subf %39, %46 : vector<1x256xf32>
    %48 = math.absf %44 : vector<1x256xf32>
    %cst_19 = arith.constant 1.000000e+00 : f32
    %49 = vector.broadcast %cst_19 : f32 to vector<1x256xf32>
    %50 = arith.cmpf ole, %48, %49 : vector<1x256xf32>
    %51 = math.absf %47 : vector<1x256xf32>
    %cst_20 = arith.constant 1.000000e+00 : f32
    %52 = vector.broadcast %cst_20 : f32 to vector<1x256xf32>
    %53 = arith.cmpf ole, %51, %52 : vector<1x256xf32>
    %54 = arith.andi %50, %53 : vector<1x256xi1>
    %cst_21 = arith.constant 0.000000e+00 : f32
    %55 = vector.broadcast %cst_21 : f32 to vector<1x256xf32>
    %56 = arith.select %54, %38, %55 : vector<1x256xi1>, vector<1x256xf32>
    %57 = vector.broadcast %56 : vector<1x256xf32> to vector<4x256xf32>
    %58 = arith.mulf %57, %26 : vector<4x256xf32>
    %59 = arith.addf %14, %58 : vector<4x256xf32>
    %c1_i32 = arith.constant 1 : i32
    %60 = tpu.dynamic_rotate %23 by %c1_i32 dim 1 : vector<5x256xf32>, i32 -> vector<5x256xf32>
    %61 = vector.extract_strided_slice %60 {offsets = [0, 0], sizes = [4, 256], strides = [1, 1]} : vector<5x256xf32> to vector<4x256xf32>
    %62 = vector.extract_strided_slice %60 {offsets = [4, 0], sizes = [1, 256], strides = [1, 1]} : vector<5x256xf32> to vector<1x256xf32>
    %c1_i32_22 = arith.constant 1 : i32
    %63 = tpu.dynamic_rotate %38 by %c1_i32_22 dim 1 : vector<1x256xf32>, i32 -> vector<1x256xf32>
    %64 = arith.subf %62, %4 : vector<1x256xf32>
    %cst_23 = arith.constant 1.550000e+01 : f32
    %65 = vector.broadcast %cst_23 : f32 to vector<1x256xf32>
    %66 = arith.addf %64, %65 : vector<1x256xf32>
    %cst_24 = arith.constant 3.125000e-02 : f32
    %67 = vector.broadcast %cst_24 : f32 to vector<1x256xf32>
    %68 = arith.mulf %66, %67 : vector<1x256xf32>
    %69 = math.floor %68 : vector<1x256xf32>
    %cst_25 = arith.constant 3.200000e+01 : f32
    %70 = vector.broadcast %cst_25 : f32 to vector<1x256xf32>
    %71 = arith.mulf %69, %70 : vector<1x256xf32>
    %72 = arith.subf %64, %71 : vector<1x256xf32>
    %73 = math.absf %69 : vector<1x256xf32>
    %cst_26 = arith.constant 1.000000e+00 : f32
    %74 = vector.broadcast %cst_26 : f32 to vector<1x256xf32>
    %75 = arith.cmpf ole, %73, %74 : vector<1x256xf32>
    %76 = math.absf %72 : vector<1x256xf32>
    %cst_27 = arith.constant 1.000000e+00 : f32
    %77 = vector.broadcast %cst_27 : f32 to vector<1x256xf32>
    %78 = arith.cmpf ole, %76, %77 : vector<1x256xf32>
    %79 = arith.andi %75, %78 : vector<1x256xi1>
    %cst_28 = arith.constant 0.000000e+00 : f32
    %80 = vector.broadcast %cst_28 : f32 to vector<1x256xf32>
    %81 = arith.select %79, %63, %80 : vector<1x256xi1>, vector<1x256xf32>
    %82 = vector.broadcast %81 : vector<1x256xf32> to vector<4x256xf32>
    %83 = arith.mulf %82, %61 : vector<4x256xf32>
    %84 = arith.addf %59, %83 : vector<4x256xf32>
    %c241_i32 = arith.constant 241 : i32
    %85 = tpu.dynamic_rotate %18 by %c241_i32 dim 1 : vector<7x256xf32>, i32 -> vector<7x256xf32>
    %c241_i32_29 = arith.constant 241 : i32
    %86 = tpu.dynamic_rotate %23 by %c241_i32_29 dim 1 : vector<5x256xf32>, i32 -> vector<5x256xf32>
    %87 = vector.extract_strided_slice %86 {offsets = [0, 0], sizes = [4, 256], strides = [1, 1]} : vector<5x256xf32> to vector<4x256xf32>
    %88 = vector.extract_strided_slice %86 {offsets = [4, 0], sizes = [1, 256], strides = [1, 1]} : vector<5x256xf32> to vector<1x256xf32>
    %89 = arith.mulf %22, %85 : vector<7x256xf32>
    %cst_30 = arith.constant dense<0.000000e+00> : vector<256xf32>
    %90 = vector.multi_reduction <add>, %89, %cst_30 [0] : vector<7x256xf32> to vector<256xf32>
    %91 = vector.shape_cast %90 : vector<256xf32> to vector<1x256xf32>
    %92 = arith.addf %17, %91 : vector<1x256xf32>
    %cst_31 = arith.constant 0.166666672 : f32
    %93 = vector.broadcast %cst_31 : f32 to vector<1x256xf32>
    %94 = arith.mulf %92, %93 : vector<1x256xf32>
    %cst_32 = arith.constant 0.000000e+00 : f32
    %95 = vector.broadcast %cst_32 : f32 to vector<1x256xf32>
    %96 = arith.maximumf %94, %95 : vector<1x256xf32>
    %cst_33 = arith.constant 0.000000e+00 : f32
    %97 = vector.broadcast %cst_33 : f32 to vector<1x256xf32>
    %98 = arith.subf %97, %96 : vector<1x256xf32>
    %99 = math.exp %98 : vector<1x256xf32>
    %100 = arith.subf %88, %4 : vector<1x256xf32>
    %cst_34 = arith.constant 1.550000e+01 : f32
    %101 = vector.broadcast %cst_34 : f32 to vector<1x256xf32>
    %102 = arith.addf %100, %101 : vector<1x256xf32>
    %cst_35 = arith.constant 3.125000e-02 : f32
    %103 = vector.broadcast %cst_35 : f32 to vector<1x256xf32>
    %104 = arith.mulf %102, %103 : vector<1x256xf32>
    %105 = math.floor %104 : vector<1x256xf32>
    %cst_36 = arith.constant 3.200000e+01 : f32
    %106 = vector.broadcast %cst_36 : f32 to vector<1x256xf32>
    %107 = arith.mulf %105, %106 : vector<1x256xf32>
    %108 = arith.subf %100, %107 : vector<1x256xf32>
    %109 = math.absf %105 : vector<1x256xf32>
    %cst_37 = arith.constant 1.000000e+00 : f32
    %110 = vector.broadcast %cst_37 : f32 to vector<1x256xf32>
    %111 = arith.cmpf ole, %109, %110 : vector<1x256xf32>
    %112 = math.absf %108 : vector<1x256xf32>
    %cst_38 = arith.constant 1.000000e+00 : f32
    %113 = vector.broadcast %cst_38 : f32 to vector<1x256xf32>
    %114 = arith.cmpf ole, %112, %113 : vector<1x256xf32>
    %115 = arith.andi %111, %114 : vector<1x256xi1>
    %cst_39 = arith.constant 0.000000e+00 : f32
    %116 = vector.broadcast %cst_39 : f32 to vector<1x256xf32>
    %117 = arith.select %115, %99, %116 : vector<1x256xi1>, vector<1x256xf32>
    %118 = vector.broadcast %117 : vector<1x256xf32> to vector<4x256xf32>
    %119 = arith.mulf %118, %87 : vector<4x256xf32>
    %120 = arith.addf %84, %119 : vector<4x256xf32>
    %c15_i32 = arith.constant 15 : i32
    %121 = tpu.dynamic_rotate %23 by %c15_i32 dim 1 : vector<5x256xf32>, i32 -> vector<5x256xf32>
    %122 = vector.extract_strided_slice %121 {offsets = [0, 0], sizes = [4, 256], strides = [1, 1]} : vector<5x256xf32> to vector<4x256xf32>
    %123 = vector.extract_strided_slice %121 {offsets = [4, 0], sizes = [1, 256], strides = [1, 1]} : vector<5x256xf32> to vector<1x256xf32>
    %c15_i32_40 = arith.constant 15 : i32
    %124 = tpu.dynamic_rotate %99 by %c15_i32_40 dim 1 : vector<1x256xf32>, i32 -> vector<1x256xf32>
    %125 = arith.subf %123, %4 : vector<1x256xf32>
    %cst_41 = arith.constant 1.550000e+01 : f32
    %126 = vector.broadcast %cst_41 : f32 to vector<1x256xf32>
    %127 = arith.addf %125, %126 : vector<1x256xf32>
    %cst_42 = arith.constant 3.125000e-02 : f32
    %128 = vector.broadcast %cst_42 : f32 to vector<1x256xf32>
    %129 = arith.mulf %127, %128 : vector<1x256xf32>
    %130 = math.floor %129 : vector<1x256xf32>
    %cst_43 = arith.constant 3.200000e+01 : f32
    %131 = vector.broadcast %cst_43 : f32 to vector<1x256xf32>
    %132 = arith.mulf %130, %131 : vector<1x256xf32>
    %133 = arith.subf %125, %132 : vector<1x256xf32>
    %134 = math.absf %130 : vector<1x256xf32>
    %cst_44 = arith.constant 1.000000e+00 : f32
    %135 = vector.broadcast %cst_44 : f32 to vector<1x256xf32>
    %136 = arith.cmpf ole, %134, %135 : vector<1x256xf32>
    %137 = math.absf %133 : vector<1x256xf32>
    %cst_45 = arith.constant 1.000000e+00 : f32
    %138 = vector.broadcast %cst_45 : f32 to vector<1x256xf32>
    %139 = arith.cmpf ole, %137, %138 : vector<1x256xf32>
    %140 = arith.andi %136, %139 : vector<1x256xi1>
    %cst_46 = arith.constant 0.000000e+00 : f32
    %141 = vector.broadcast %cst_46 : f32 to vector<1x256xf32>
    %142 = arith.select %140, %124, %141 : vector<1x256xi1>, vector<1x256xf32>
    %143 = vector.broadcast %142 : vector<1x256xf32> to vector<4x256xf32>
    %144 = arith.mulf %143, %122 : vector<4x256xf32>
    %145 = arith.addf %120, %144 : vector<4x256xf32>
    %c240_i32 = arith.constant 240 : i32
    %146 = tpu.dynamic_rotate %18 by %c240_i32 dim 1 : vector<7x256xf32>, i32 -> vector<7x256xf32>
    %c240_i32_47 = arith.constant 240 : i32
    %147 = tpu.dynamic_rotate %23 by %c240_i32_47 dim 1 : vector<5x256xf32>, i32 -> vector<5x256xf32>
    %148 = vector.extract_strided_slice %147 {offsets = [0, 0], sizes = [4, 256], strides = [1, 1]} : vector<5x256xf32> to vector<4x256xf32>
    %149 = vector.extract_strided_slice %147 {offsets = [4, 0], sizes = [1, 256], strides = [1, 1]} : vector<5x256xf32> to vector<1x256xf32>
    %150 = arith.mulf %22, %146 : vector<7x256xf32>
    %cst_48 = arith.constant dense<0.000000e+00> : vector<256xf32>
    %151 = vector.multi_reduction <add>, %150, %cst_48 [0] : vector<7x256xf32> to vector<256xf32>
    %152 = vector.shape_cast %151 : vector<256xf32> to vector<1x256xf32>
    %153 = arith.addf %17, %152 : vector<1x256xf32>
    %cst_49 = arith.constant 0.166666672 : f32
    %154 = vector.broadcast %cst_49 : f32 to vector<1x256xf32>
    %155 = arith.mulf %153, %154 : vector<1x256xf32>
    %cst_50 = arith.constant 0.000000e+00 : f32
    %156 = vector.broadcast %cst_50 : f32 to vector<1x256xf32>
    %157 = arith.maximumf %155, %156 : vector<1x256xf32>
    %cst_51 = arith.constant 0.000000e+00 : f32
    %158 = vector.broadcast %cst_51 : f32 to vector<1x256xf32>
    %159 = arith.subf %158, %157 : vector<1x256xf32>
    %160 = math.exp %159 : vector<1x256xf32>
    %161 = arith.subf %149, %4 : vector<1x256xf32>
    %cst_52 = arith.constant 1.550000e+01 : f32
    %162 = vector.broadcast %cst_52 : f32 to vector<1x256xf32>
    %163 = arith.addf %161, %162 : vector<1x256xf32>
    %cst_53 = arith.constant 3.125000e-02 : f32
    %164 = vector.broadcast %cst_53 : f32 to vector<1x256xf32>
    %165 = arith.mulf %163, %164 : vector<1x256xf32>
    %166 = math.floor %165 : vector<1x256xf32>
    %cst_54 = arith.constant 3.200000e+01 : f32
    %167 = vector.broadcast %cst_54 : f32 to vector<1x256xf32>
    %168 = arith.mulf %166, %167 : vector<1x256xf32>
    %169 = arith.subf %161, %168 : vector<1x256xf32>
    %170 = math.absf %166 : vector<1x256xf32>
    %cst_55 = arith.constant 1.000000e+00 : f32
    %171 = vector.broadcast %cst_55 : f32 to vector<1x256xf32>
    %172 = arith.cmpf ole, %170, %171 : vector<1x256xf32>
    %173 = math.absf %169 : vector<1x256xf32>
    %cst_56 = arith.constant 1.000000e+00 : f32
    %174 = vector.broadcast %cst_56 : f32 to vector<1x256xf32>
    %175 = arith.cmpf ole, %173, %174 : vector<1x256xf32>
    %176 = arith.andi %172, %175 : vector<1x256xi1>
    %cst_57 = arith.constant 0.000000e+00 : f32
    %177 = vector.broadcast %cst_57 : f32 to vector<1x256xf32>
    %178 = arith.select %176, %160, %177 : vector<1x256xi1>, vector<1x256xf32>
    %179 = vector.broadcast %178 : vector<1x256xf32> to vector<4x256xf32>
    %180 = arith.mulf %179, %148 : vector<4x256xf32>
    %181 = arith.addf %145, %180 : vector<4x256xf32>
    %c16_i32 = arith.constant 16 : i32
    %182 = tpu.dynamic_rotate %23 by %c16_i32 dim 1 : vector<5x256xf32>, i32 -> vector<5x256xf32>
    %183 = vector.extract_strided_slice %182 {offsets = [0, 0], sizes = [4, 256], strides = [1, 1]} : vector<5x256xf32> to vector<4x256xf32>
    %184 = vector.extract_strided_slice %182 {offsets = [4, 0], sizes = [1, 256], strides = [1, 1]} : vector<5x256xf32> to vector<1x256xf32>
    %c16_i32_58 = arith.constant 16 : i32
    %185 = tpu.dynamic_rotate %160 by %c16_i32_58 dim 1 : vector<1x256xf32>, i32 -> vector<1x256xf32>
    %186 = arith.subf %184, %4 : vector<1x256xf32>
    %cst_59 = arith.constant 1.550000e+01 : f32
    %187 = vector.broadcast %cst_59 : f32 to vector<1x256xf32>
    %188 = arith.addf %186, %187 : vector<1x256xf32>
    %cst_60 = arith.constant 3.125000e-02 : f32
    %189 = vector.broadcast %cst_60 : f32 to vector<1x256xf32>
    %190 = arith.mulf %188, %189 : vector<1x256xf32>
    %191 = math.floor %190 : vector<1x256xf32>
    %cst_61 = arith.constant 3.200000e+01 : f32
    %192 = vector.broadcast %cst_61 : f32 to vector<1x256xf32>
    %193 = arith.mulf %191, %192 : vector<1x256xf32>
    %194 = arith.subf %186, %193 : vector<1x256xf32>
    %195 = math.absf %191 : vector<1x256xf32>
    %cst_62 = arith.constant 1.000000e+00 : f32
    %196 = vector.broadcast %cst_62 : f32 to vector<1x256xf32>
    %197 = arith.cmpf ole, %195, %196 : vector<1x256xf32>
    %198 = math.absf %194 : vector<1x256xf32>
    %cst_63 = arith.constant 1.000000e+00 : f32
    %199 = vector.broadcast %cst_63 : f32 to vector<1x256xf32>
    %200 = arith.cmpf ole, %198, %199 : vector<1x256xf32>
    %201 = arith.andi %197, %200 : vector<1x256xi1>
    %cst_64 = arith.constant 0.000000e+00 : f32
    %202 = vector.broadcast %cst_64 : f32 to vector<1x256xf32>
    %203 = arith.select %201, %185, %202 : vector<1x256xi1>, vector<1x256xf32>
    %204 = vector.broadcast %203 : vector<1x256xf32> to vector<4x256xf32>
    %205 = arith.mulf %204, %183 : vector<4x256xf32>
    %206 = arith.addf %181, %205 : vector<4x256xf32>
    %c239_i32 = arith.constant 239 : i32
    %207 = tpu.dynamic_rotate %18 by %c239_i32 dim 1 : vector<7x256xf32>, i32 -> vector<7x256xf32>
    %c239_i32_65 = arith.constant 239 : i32
    %208 = tpu.dynamic_rotate %23 by %c239_i32_65 dim 1 : vector<5x256xf32>, i32 -> vector<5x256xf32>
    %209 = vector.extract_strided_slice %208 {offsets = [0, 0], sizes = [4, 256], strides = [1, 1]} : vector<5x256xf32> to vector<4x256xf32>
    %210 = vector.extract_strided_slice %208 {offsets = [4, 0], sizes = [1, 256], strides = [1, 1]} : vector<5x256xf32> to vector<1x256xf32>
    %211 = arith.mulf %22, %207 : vector<7x256xf32>
    %cst_66 = arith.constant dense<0.000000e+00> : vector<256xf32>
    %212 = vector.multi_reduction <add>, %211, %cst_66 [0] : vector<7x256xf32> to vector<256xf32>
    %213 = vector.shape_cast %212 : vector<256xf32> to vector<1x256xf32>
    %214 = arith.addf %17, %213 : vector<1x256xf32>
    %cst_67 = arith.constant 0.166666672 : f32
    %215 = vector.broadcast %cst_67 : f32 to vector<1x256xf32>
    %216 = arith.mulf %214, %215 : vector<1x256xf32>
    %cst_68 = arith.constant 0.000000e+00 : f32
    %217 = vector.broadcast %cst_68 : f32 to vector<1x256xf32>
    %218 = arith.maximumf %216, %217 : vector<1x256xf32>
    %cst_69 = arith.constant 0.000000e+00 : f32
    %219 = vector.broadcast %cst_69 : f32 to vector<1x256xf32>
    %220 = arith.subf %219, %218 : vector<1x256xf32>
    %221 = math.exp %220 : vector<1x256xf32>
    %222 = arith.subf %210, %4 : vector<1x256xf32>
    %cst_70 = arith.constant 1.550000e+01 : f32
    %223 = vector.broadcast %cst_70 : f32 to vector<1x256xf32>
    %224 = arith.addf %222, %223 : vector<1x256xf32>
    %cst_71 = arith.constant 3.125000e-02 : f32
    %225 = vector.broadcast %cst_71 : f32 to vector<1x256xf32>
    %226 = arith.mulf %224, %225 : vector<1x256xf32>
    %227 = math.floor %226 : vector<1x256xf32>
    %cst_72 = arith.constant 3.200000e+01 : f32
    %228 = vector.broadcast %cst_72 : f32 to vector<1x256xf32>
    %229 = arith.mulf %227, %228 : vector<1x256xf32>
    %230 = arith.subf %222, %229 : vector<1x256xf32>
    %231 = math.absf %227 : vector<1x256xf32>
    %cst_73 = arith.constant 1.000000e+00 : f32
    %232 = vector.broadcast %cst_73 : f32 to vector<1x256xf32>
    %233 = arith.cmpf ole, %231, %232 : vector<1x256xf32>
    %234 = math.absf %230 : vector<1x256xf32>
    %cst_74 = arith.constant 1.000000e+00 : f32
    %235 = vector.broadcast %cst_74 : f32 to vector<1x256xf32>
    %236 = arith.cmpf ole, %234, %235 : vector<1x256xf32>
    %237 = arith.andi %233, %236 : vector<1x256xi1>
    %cst_75 = arith.constant 0.000000e+00 : f32
    %238 = vector.broadcast %cst_75 : f32 to vector<1x256xf32>
    %239 = arith.select %237, %221, %238 : vector<1x256xi1>, vector<1x256xf32>
    %240 = vector.broadcast %239 : vector<1x256xf32> to vector<4x256xf32>
    %241 = arith.mulf %240, %209 : vector<4x256xf32>
    %242 = arith.addf %206, %241 : vector<4x256xf32>
    %c17_i32 = arith.constant 17 : i32
    %243 = tpu.dynamic_rotate %23 by %c17_i32 dim 1 : vector<5x256xf32>, i32 -> vector<5x256xf32>
    %244 = vector.extract_strided_slice %243 {offsets = [0, 0], sizes = [4, 256], strides = [1, 1]} : vector<5x256xf32> to vector<4x256xf32>
    %245 = vector.extract_strided_slice %243 {offsets = [4, 0], sizes = [1, 256], strides = [1, 1]} : vector<5x256xf32> to vector<1x256xf32>
    %c17_i32_76 = arith.constant 17 : i32
    %246 = tpu.dynamic_rotate %221 by %c17_i32_76 dim 1 : vector<1x256xf32>, i32 -> vector<1x256xf32>
    %247 = arith.subf %245, %4 : vector<1x256xf32>
    %cst_77 = arith.constant 1.550000e+01 : f32
    %248 = vector.broadcast %cst_77 : f32 to vector<1x256xf32>
    %249 = arith.addf %247, %248 : vector<1x256xf32>
    %cst_78 = arith.constant 3.125000e-02 : f32
    %250 = vector.broadcast %cst_78 : f32 to vector<1x256xf32>
    %251 = arith.mulf %249, %250 : vector<1x256xf32>
    %252 = math.floor %251 : vector<1x256xf32>
    %cst_79 = arith.constant 3.200000e+01 : f32
    %253 = vector.broadcast %cst_79 : f32 to vector<1x256xf32>
    %254 = arith.mulf %252, %253 : vector<1x256xf32>
    %255 = arith.subf %247, %254 : vector<1x256xf32>
    %256 = math.absf %252 : vector<1x256xf32>
    %cst_80 = arith.constant 1.000000e+00 : f32
    %257 = vector.broadcast %cst_80 : f32 to vector<1x256xf32>
    %258 = arith.cmpf ole, %256, %257 : vector<1x256xf32>
    %259 = math.absf %255 : vector<1x256xf32>
    %cst_81 = arith.constant 1.000000e+00 : f32
    %260 = vector.broadcast %cst_81 : f32 to vector<1x256xf32>
    %261 = arith.cmpf ole, %259, %260 : vector<1x256xf32>
    %262 = arith.andi %258, %261 : vector<1x256xi1>
    %cst_82 = arith.constant 0.000000e+00 : f32
    %263 = vector.broadcast %cst_82 : f32 to vector<1x256xf32>
    %264 = arith.select %262, %246, %263 : vector<1x256xi1>, vector<1x256xf32>
    %265 = vector.broadcast %264 : vector<1x256xf32> to vector<4x256xf32>
    %266 = arith.mulf %265, %244 : vector<4x256xf32>
    %267 = arith.addf %242, %266 : vector<4x256xf32>
    %c0_83 = arith.constant 0 : index
    %c0_84 = arith.constant 0 : index
    %268 = vector.load %arg4[%c0_83, %c0_84] : memref<4x4xf32, #tpu.memory_space<vmem>>, vector<4x4xf32>
    %cst_85 = arith.constant dense<0.000000e+00> : vector<4x256xf32>
    %269 = tpu.matmul %268, %267, %cst_85 {dimension_numbers = #tpu.dot_dimension_numbers<[1], [0], [0], [1], [0, 0, 1, 1], [], []>} : vector<4x4xf32>, vector<4x256xf32>, vector<4x256xf32> -> vector<4x256xf32>
    %c0_86 = arith.constant 0 : index
    %c0_87 = arith.constant 0 : index
    %270 = vector.load %arg5[%c0_86, %c0_87] : memref<4x1xf32, #tpu.memory_space<vmem>>, vector<4x1xf32>
    %271 = vector.broadcast %270 : vector<4x1xf32> to vector<4x256xf32>
    %272 = arith.addf %269, %271 : vector<4x256xf32>
    %273 = arith.subf %3, %272 : vector<4x256xf32>
    %c0_88 = arith.constant 0 : index
    %c0_89 = arith.constant 0 : index
    %c0_90 = arith.constant 0 : index
    %274 = vector.load %arg6[%c0_88, %c0_89, %c0_90] : memref<1x4x256xf32, #tpu.memory_space<vmem>>, vector<1x4x256xf32>
    %275 = vector.shape_cast %274 : vector<1x4x256xf32> to vector<4x256xf32>
    %276 = vector.shape_cast %273 : vector<4x256xf32> to vector<1x4x256xf32>
    tpu.vector_store %arg6[%c0_88, %c0_89, %c0_90], %276 {strides = array<i32>} : memref<1x4x256xf32, #tpu.memory_space<vmem>>, vector<1x4x256xf32>,
    return
  }
  func.func @transform_0(%arg0: i32) -> (i32, i32, i32) {
    %c0_i32 = arith.constant 0 : i32
    %c0_i32_0 = arith.constant 0 : i32
    %c0_i32_1 = arith.constant 0 : i32
    return %arg0, %c0_i32, %c0_i32_0 : i32, i32, i32
  }
  func.func @transform_1(%arg0: i32) -> (i32, i32, i32) {
    %c0_i32 = arith.constant 0 : i32
    %c0_i32_0 = arith.constant 0 : i32
    %c0_i32_1 = arith.constant 0 : i32
    return %arg0, %c0_i32, %c0_i32_0 : i32, i32, i32
  }
  func.func @transform_2(%arg0: i32) -> (i32, i32) {
    %c0_i32 = arith.constant 0 : i32
    %c0_i32_0 = arith.constant 0 : i32
    %c0_i32_1 = arith.constant 0 : i32
    return %c0_i32, %c0_i32_0 : i32, i32
  }
  func.func @transform_3(%arg0: i32) -> (i32, i32) {
    %c0_i32 = arith.constant 0 : i32
    %c0_i32_0 = arith.constant 0 : i32
    %c0_i32_1 = arith.constant 0 : i32
    return %c0_i32, %c0_i32_0 : i32, i32
  }
  func.func @transform_4(%arg0: i32) -> (i32, i32) {
    %c0_i32 = arith.constant 0 : i32
    %c0_i32_0 = arith.constant 0 : i32
    %c0_i32_1 = arith.constant 0 : i32
    return %c0_i32, %c0_i32_0 : i32, i32
  }
  func.func @transform_5(%arg0: i32) -> (i32, i32, i32) {
    %c0_i32 = arith.constant 0 : i32
    %c0_i32_0 = arith.constant 0 : i32
    %c0_i32_1 = arith.constant 0 : i32
    return %arg0, %c0_i32, %c0_i32_0 : i32, i32, i32
  }
}

</mosaic_0001>

<llo_original>
// kernel: tpu_custom_call.1
$region0: #{tpu_custom_call.1}
  #allocation0 [shape = 'u32[]', space=smem, size = 0x4, offset = 0x4, fixed_abs, tag = 'smem constant byte address 0x4 - core index']
  #allocation1 [shape = 'u32[72,128]{1,0:T(1,128)}', space=vmem, size = 0x9000, scoped, tag = 'internal scratch']
  %s0 = inlined_call_operand.vmem [shape: f32[2,6,256], index: 0, kind: input, shape index: {}]
  %s1 = inlined_call_operand.vmem [shape: f32[2,4,256], index: 1, kind: input, shape index: {}]
  %s2 = inlined_call_operand.vmem [shape: f32[1,256], index: 2, kind: input, shape index: {}]
  %s3 = inlined_call_operand.vmem [shape: f32[4,4], index: 3, kind: input, shape index: {}]
  %s4 = inlined_call_operand.vmem [shape: f32[4,1], index: 4, kind: input, shape index: {}]
  %s5 = inlined_call_operand.hbm [shape: f32[2,4,256], index: 5, kind: output, shape index: {}]
  %s6 = sld [smem:[#allocation0]]
  $region53: #{tpu_custom_call.1} parent=0
    _
  %s8 = ssub.s32 1, %s6
  %s9 = scalar_select 0, %s8, %s6
  $region1: #{tpu_custom_call.1} parent=0
    #allocation2 [shape = 'u8[8192]{0}', space=vmem, size = 0x2000, scoped, tag = 'output window, operand 0']
    #allocation3 [shape = 's32[2]{0}', space=sflag, size = 0x8, scoped, tag = 'scoped memory for tpu_custom_call.1']
    %10 = vsyncpa [#allocation3], 0
    %s11 = scalar_lea.sflag [#allocation3], 1
    %12 = vsyncpa %s11, 0
    loop: start=0, step=1, limit=4
    $region2: #{tpu_custom_call.1} parent=1 // loop_pre_header
      _
    $region3: #{tpu_custom_call.1} parent=1 // loop_header
      %s14 = sphi 0, %s18
      %p15 = scmp.ge.s32.totalorder %s14, 4
      %s24 = sphi 0, %s26
      %s27 = sphi 0, %s24
      %s28 = sphi 0, %s27
      %s44 = sphi 0, %s28
      %s50 = sphi 0, %s52
      %s53 = sphi 0, %s50
      %s54 = sphi 0, %s53
      %s70 = sphi 0, %s54
      %s74 = sphi 0, %s74
      %s76 = sphi 0, %s74
      %s77 = sphi 0, %s76
      %s91 = sphi 0, %s77
      %s95 = sphi 0, %s95
      %s97 = sphi 0, %s95
      %s98 = sphi 0, %s97
      %s112 = sphi 0, %s98
      %s116 = sphi 0, %s116
      %s118 = sphi 0, %s116
      %s119 = sphi 0, %s118
      %s133 = sphi 0, %s119
      %s139 = sphi 0, %s141
      %s142 = sphi 0, %s139
      %s143 = sphi 0, %s142
      %s159 = sphi 0, %s143
    $region4: #{tpu_custom_call.1} parent=1 // loop_header_branch
      %17 = sbr.rel (%p15) target = $region8
    $region5: #{tpu_custom_call.1} parent=1 // loop_body
      %s19 = ssub.s32 %s14, 1
      %s20 = ssub.s32 %s14, 2
      %s21 = sadd.s32 %s14, 1
      %s22 = ssub.s32 %s14, %s21
      %p23 = scmp.eq.s32.totalorder %s22, 0
      %s25 = sadd.s32 %s24, 1
      %s26 = scalar_select %p23, %s24, %s25
      %p29 = pneg %p23
      %p30 = scmp.eq.s32.totalorder %s14, 1
      %p31 = por %p29, %p30
      %p32 = scmp.ne.s32.totalorder %s24, %s27
      %p33 = scmp.eq.s32.totalorder %s14, 0
      %p34 = por %p32, %p33
      %p35 = scmp.ne.s32.totalorder %s24, %s27
      %p36 = scmp.eq.s32.totalorder %s19, 1
      %p37 = por %p35, %p36
      %p38 = scmp.ne.s32.totalorder %s27, %s28
      %p39 = scmp.eq.s32.totalorder %s19, 0
      %p40 = por %p38, %p39
      %p41 = scmp.ne.s32.totalorder %s27, %s28
      %p42 = scmp.eq.s32.totalorder %s20, 1
      %p43 = por %p41, %p42
      %p45 = scmp.ne.s32.totalorder %s28, %s44
      %p46 = scmp.eq.s32.totalorder %s20, 0
      %p47 = por %p45, %p46
      %s48 = ssub.s32 %s14, %s21
      %p49 = scmp.eq.s32.totalorder %s48, 0
      %s51 = sadd.s32 %s50, 1
      %s52 = scalar_select %p49, %s50, %s51
      %p55 = pneg %p49
      %p56 = scmp.eq.s32.totalorder %s14, 1
      %p57 = por %p55, %p56
      %p58 = scmp.ne.s32.totalorder %s50, %s53
      %p59 = scmp.eq.s32.totalorder %s14, 0
      %p60 = por %p58, %p59
      %p61 = scmp.ne.s32.totalorder %s50, %s53
      %p62 = scmp.eq.s32.totalorder %s19, 1
      %p63 = por %p61, %p62
      %p64 = scmp.ne.s32.totalorder %s53, %s54
      %p65 = scmp.eq.s32.totalorder %s19, 0
      %p66 = por %p64, %p65
      %p67 = scmp.ne.s32.totalorder %s53, %s54
      %p68 = scmp.eq.s32.totalorder %s20, 1
      %p69 = por %p67, %p68
      %p71 = scmp.ne.s32.totalorder %s54, %s70
      %p72 = scmp.eq.s32.totalorder %s20, 0
      %p73 = por %p71, %p72
      %s75 = sadd.s32 %s74, 1
      %p78 = scmp.eq.s32.totalorder %s14, 1
      %p79 = scmp.ne.s32.totalorder %s74, %s76
      %p80 = scmp.eq.s32.totalorder %s14, 0
      %p81 = por %p79, %p80
      %p82 = scmp.ne.s32.totalorder %s74, %s76
      %p83 = scmp.eq.s32.totalorder %s19, 1
      %p84 = por %p82, %p83
      %p85 = scmp.ne.s32.totalorder %s76, %s77
      %p86 = scmp.eq.s32.totalorder %s19, 0
      %p87 = por %p85, %p86
      %p88 = scmp.ne.s32.totalorder %s76, %s77
      %p89 = scmp.eq.s32.totalorder %s20, 1
      %p90 = por %p88, %p89
      %p92 = scmp.ne.s32.totalorder %s77, %s91
      %p93 = scmp.eq.s32.totalorder %s20, 0
      %p94 = por %p92, %p93
      %s96 = sadd.s32 %s95, 1
      %p99 = scmp.eq.s32.totalorder %s14, 1
      %p100 = scmp.ne.s32.totalorder %s95, %s97
      %p101 = scmp.eq.s32.totalorder %s14, 0
      %p102 = por %p100, %p101
      %p103 = scmp.ne.s32.totalorder %s95, %s97
      %p104 = scmp.eq.s32.totalorder %s19, 1
      %p105 = por %p103, %p104
      %p106 = scmp.ne.s32.totalorder %s97, %s98
      %p107 = scmp.eq.s32.totalorder %s19, 0
      %p108 = por %p106, %p107
      %p109 = scmp.ne.s32.totalorder %s97, %s98
      %p110 = scmp.eq.s32.totalorder %s20, 1
      %p111 = por %p109, %p110
      %p113 = scmp.ne.s32.totalorder %s98, %s112
      %p114 = scmp.eq.s32.totalorder %s20, 0
      %p115 = por %p113, %p114
      %s117 = sadd.s32 %s116, 1
      %p120 = scmp.eq.s32.totalorder %s14, 1
      %p121 = scmp.ne.s32.totalorder %s116, %s118
      %p122 = scmp.eq.s32.totalorder %s14, 0
      %p123 = por %p121, %p122
      %p124 = scmp.ne.s32.totalorder %s116, %s118
      %p125 = scmp.eq.s32.totalorder %s19, 1
      %p126 = por %p124, %p125
      %p127 = scmp.ne.s32.totalorder %s118, %s119
      %p128 = scmp.eq.s32.totalorder %s19, 0
      %p129 = por %p127, %p128
      %p130 = scmp.ne.s32.totalorder %s118, %s119
      %p131 = scmp.eq.s32.totalorder %s20, 1
      %p132 = por %p130, %p131
      %p134 = scmp.ne.s32.totalorder %s119, %s133
      %p135 = scmp.eq.s32.totalorder %s20, 0
      %p136 = por %p134, %p135
      %s137 = ssub.s32 %s14, %s21
      %p138 = scmp.eq.s32.totalorder %s137, 0
      %s140 = sadd.s32 %s139, 1
      %s141 = scalar_select %p138, %s139, %s140
      %p144 = pneg %p138
      %p145 = scmp.eq.s32.totalorder %s14, 1
      %p146 = por %p144, %p145
      %p147 = scmp.ne.s32.totalorder %s139, %s142
      %p148 = scmp.eq.s32.totalorder %s14, 0
      %p149 = por %p147, %p148
      %p150 = scmp.ne.s32.totalorder %s139, %s142
      %p151 = scmp.eq.s32.totalorder %s19, 1
      %p152 = por %p150, %p151
      %p153 = scmp.ne.s32.totalorder %s142, %s143
      %p154 = scmp.eq.s32.totalorder %s19, 0
      %p155 = por %p153, %p154
      %p156 = scmp.ne.s32.totalorder %s142, %s143
      %p157 = scmp.eq.s32.totalorder %s20, 1
      %p158 = por %p156, %p157
      %p160 = scmp.ne.s32.totalorder %s143, %s159
      %p161 = scmp.eq.s32.totalorder %s20, 0
      %p162 = por %p160, %p161
      %p163 = scmp.le.s32.totalorder 1, %s14
      %p164 = scmp.lt.s32.totalorder %s14, 3
      %p165 = pnand %p163, %p164
      %p166 = pneg %p165
      // Predicated region
      $region9: #{tpu_custom_call.1} parent=5 // pred_check
        _
      $region10: #{tpu_custom_call.1} parent=5 // pred_check_branch
        %168 = sbr.rel (%p165) target = $region12
      $region11: #{tpu_custom_call.1} parent=5 // pred_region
        %s169 = ssub.s32 %s14, 1
        // Predicated region
        $region13: #{tpu_custom_call.1} parent=11 // pred_check
          %p170 = pneg %p87
        $region14: #{tpu_custom_call.1} parent=11 // pred_check_branch
          %172 = sbr.rel (%p170) target = $region16
        $region15: #{tpu_custom_call.1} parent=11 // pred_region
          _
        $region16: #{tpu_custom_call.1} parent=11 // pred_fallthru
          _
        // Predicated region
        $region17: #{tpu_custom_call.1} parent=11 // pred_check
          %p173 = pneg %p108
        $region18: #{tpu_custom_call.1} parent=11 // pred_check_branch
          %175 = sbr.rel (%p173) target = $region20
        $region19: #{tpu_custom_call.1} parent=11 // pred_region
          _
        $region20: #{tpu_custom_call.1} parent=11 // pred_fallthru
          _
        // Predicated region
        $region21: #{tpu_custom_call.1} parent=11 // pred_check
          %p176 = pneg %p129
        $region22: #{tpu_custom_call.1} parent=11 // pred_check_branch
          %178 = sbr.rel (%p176) target = $region24
        $region23: #{tpu_custom_call.1} parent=11 // pred_region
          _
        $region24: #{tpu_custom_call.1} parent=11 // pred_fallthru
          _
      $region12: #{tpu_custom_call.1} parent=5 // pred_fallthru
        _
      %p179 = scmp.lt.s32.totalorder %s14, 2
      // Predicated region
      $region25: #{tpu_custom_call.1} parent=5 // pred_check
        %p180 = pneg %p179
      $region26: #{tpu_custom_call.1} parent=5 // pred_check_branch
        %182 = sbr.rel (%p180) target = $region28
      $region27: #{tpu_custom_call.1} parent=5 // pred_region
        // Predicated region
        $region29: #{tpu_custom_call.1} parent=27 // pred_check
          %p183 = pneg %p34
        $region30: #{tpu_custom_call.1} parent=27 // pred_check_branch
          %185 = sbr.rel (%p183) target = $region32
        $region31: #{tpu_custom_call.1} parent=27 // pred_region
          %p186 = scmp.lt.s32.totalorder %s14, 1
          %s187 = scalar_select %p186, %s14, 1
          %s188 = smul.addr %s187, 2
          %s189 = smul.addr %s188, 8
          %s190 = scalar_lea.vmem %s0, %s189
        $region32: #{tpu_custom_call.1} parent=27 // pred_fallthru
          _
        // Predicated region
        $region33: #{tpu_custom_call.1} parent=27 // pred_check
          %p191 = pneg %p60
        $region34: #{tpu_custom_call.1} parent=27 // pred_check_branch
          %193 = sbr.rel (%p191) target = $region36
        $region35: #{tpu_custom_call.1} parent=27 // pred_region
          %p194 = scmp.lt.s32.totalorder %s14, 1
          %s195 = scalar_select %p194, %s14, 1
          %s196 = smul.addr %s195, 2
          %s197 = smul.addr %s196, 4
          %s198 = scalar_lea.vmem %s1, %s197
        $region36: #{tpu_custom_call.1} parent=27 // pred_fallthru
          _
      $region28: #{tpu_custom_call.1} parent=5 // pred_fallthru
        _
      %p199 = scmp.le.s32.totalorder 1, %s14
      %p200 = scmp.lt.s32.totalorder %s14, 3
      %p201 = pnand %p199, %p200
      %p202 = pneg %p201
      // Predicated region
      $region37: #{tpu_custom_call.1} parent=5 // pred_check
        _
      $region38: #{tpu_custom_call.1} parent=5 // pred_check_branch
        %204 = sbr.rel (%p201) target = $region40
      $region39: #{tpu_custom_call.1} parent=5 // pred_region
        %s205 = ssub.s32 %s14, 1
        %p206 = scmp.lt.s32.totalorder %s19, 1
        %s207 = scalar_select %p206, %s19, 1
        %s208 = smul.addr %s207, 2
        %s209 = smul.addr %s208, 8
        %s210 = scalar_lea.vmem %s0, %s209
        %p211 = pneg %p40
        %p212 = pneg %p37
        %p213 = scmp.lt.s32.totalorder %s19, 1
        %s214 = scalar_select %p213, %s19, 1
        %s215 = smul.addr %s214, 2
        %s216 = smul.addr %s215, 4
        %s217 = scalar_lea.vmem %s1, %s216
        %p218 = pneg %p66
        %p219 = pneg %p63
        %p220 = pneg %p87
        %p221 = pneg %p84
        %p222 = pneg %p108
        %p223 = pneg %p105
        %p224 = pneg %p129
        %p225 = pneg %p126
        %p226 = pneg %p155
        %p227 = pneg %p152
        %s228 = sand.u32 %s142, 1
        %s229 = scalar_lea.sflag [#allocation3], %s228
        %s230 = sand.u32 %s142, 1
        %s231 = smul.addr %s230, 8
        %s232 = scalar_lea.vmem [#allocation2], %s231
        %p233 = scmp.lt.s32.totalorder %s19, 1
        %s234 = scalar_select %p233, %s19, 1
        %s235 = smul.addr %s234, 2
        %s236 = smul.addr %s235, 8
        %s237 = scalar_lea.vmem %s0, %s236
        %p238 = scmp.lt.s32.totalorder %s19, 1
        %s239 = scalar_select %p238, %s19, 1
        %s240 = smul.addr %s239, 2
        %s241 = smul.addr %s240, 4
        %s242 = scalar_lea.vmem %s1, %s241
        %v243 = vld [vmem:[%s237] sm:$0x3f]
        %v244 = vld [vmem:[%s237 + $0x8] sm:$0x3f]
        %v245 = vld [vmem:[%s242] sm:$0xff]
        %v246 = vld [vmem:[%s2] sm:$0x3]
        %248 = vst [vmem:[#allocation1] ss:$2 sm:$0xff] %v245
        %v249 = vld.sshfl [vmem:[#allocation1] sm:$0xff pattern:$0x75316420]
        %v250 = vld.sshfl [vmem:[#allocation1 + $0x8] sm:$0xff pattern:$0x75316420]
        %vm253 = vcmask 1043456
        %v254 = vsel %vm253, %v249, -inf
        %v255 = vrot.slane %v254, 4
        %v256 = vmax.f32 %v254, %v255
        %v257 = vrot.slane %v256, 2
        %v258 = vmax.f32 %v256, %v257
        %v259 = vrot.slane %v258, 1
        %v260 = vmax.f32 %v258, %v259
        %v261 = vsel %vm253, %v250, -inf
        %v262 = vrot.slane %v261, 4
        %v263 = vmax.f32 %v261, %v262
        %v264 = vrot.slane %v263, 2
        %v265 = vmax.f32 %v263, %v264
        %v266 = vrot.slane %v265, 1
        %v267 = vmax.f32 %v265, %v266
        %v270 = vrot.slane %v267, 4
        %v271 = vsel %vm253, %v260, %v270
        %v273 = vsub.f32 %v245, %v271
        %v274 = vmul.f32 %v273, 1.442695
        %v275 = vpow.pop %v274
        %277 = vst [vmem:[#allocation1] ss:$2 sm:$0xff] %v275
        %v278 = vld.sshfl [vmem:[#allocation1] sm:$0xff pattern:$0x75316420]
        %v279 = vld.sshfl [vmem:[#allocation1 + $0x8] sm:$0xff pattern:$0x75316420]
        %v282 = vsel %vm253, %v278, 0.0
        %v283 = vrot.slane %v282, 4
        %v284 = vadd.f32 %v282, %v283
        %v285 = vrot.slane %v284, 2
        %v286 = vadd.f32 %v284, %v285
        %v287 = vrot.slane %v286, 1
        %v288 = vadd.f32 %v286, %v287
        %v289 = vsel %vm253, %v279, 0.0
        %v290 = vrot.slane %v289, 4
        %v291 = vadd.f32 %v289, %v290
        %v292 = vrot.slane %v291, 2
        %v293 = vadd.f32 %v291, %v292
        %v294 = vrot.slane %v293, 1
        %v295 = vadd.f32 %v293, %v294
        %v296 = vrcp.pop %v288
        %v297 = vrcp.pop %v295
        %v300 = vrot.slane %v297, 4
        %v301 = vsel %vm253, %v296, %v300
        %v303 = vmul.f32 %v275, %v301
        %v304 = vmul.f32 %v243, %v243
        %v305 = vmul.f32 %v244, %v244
        %vm306 = vcmask 1045504
        %v307 = vsel %vm306, %v304, 0.0
        %v308 = vrot.slane %v307, 4
        %v309 = vadd.f32 %v307, %v308
        %v310 = vrot.slane %v309, 2
        %v311 = vadd.f32 %v309, %v310
        %v312 = vrot.slane %v311, 1
        %v313 = vadd.f32 %v311, %v312
        %v314 = vsel %vm306, %v305, 0.0
        %v315 = vrot.slane %v314, 4
        %v316 = vadd.f32 %v314, %v315
        %v317 = vrot.slane %v316, 2
        %v318 = vadd.f32 %v316, %v317
        %v319 = vrot.slane %v318, 1
        %v320 = vadd.f32 %v318, %v319
        %v321 = vsel %vm306, %v243, %v313
        %v322 = vsel %vm306, %v244, %v320
        %v323 = vmul.f32 %v243, -2.0
        %v324 = vmul.f32 %v244, -2.0
        %v325 = vsel %vm306, %v323, 1.0
        %v326 = vsel %vm306, %v324, 1.0
        %328 = vst [vmem:[#allocation1] ss:$2 sm:$0xff] %v303
        %v329 = vld.sshfl [vmem:[#allocation1] sm:$0xff pattern:$0x75316420]
        %v330 = vld.sshfl [vmem:[#allocation1 + $0x8] sm:$0xff pattern:$0x75316420]
        %v334 = vperm.slane %v246, 0
        %v335 = vperm.slane %v246, 1
        %v338 = vsel %vm253, %v329, %v334
        %v339 = vsel %vm253, %v330, %v335
        %340 = vrot.lane.b32.xlu0 %v321, 127
        %v341 = vpop.permute.xlu0 %340
        %342 = vrot.lane.b32.xlu0 %v322, 127
        %v343 = vpop.permute.xlu0 %342
        %v344 = vlaneseq
        %v345 = vand.u32 %v344, 127
        %vm346 = vcmp.lt.s32.totalorder %v345, 127
        %v347 = vsel %vm346, %v341, %v343
        %v348 = vsel %vm346, %v343, %v341
        %349 = vrot.lane.b32.xlu0 %v338, 127
        %v350 = vpop.permute.xlu0 %349
        %351 = vrot.lane.b32.xlu0 %v339, 127
        %v352 = vpop.permute.xlu0 %351
        %v353 = vsel %vm346, %v350, %v352
        %v354 = vsel %vm346, %v352, %v350
        %v355 = vmul.f32 %v325, %v347
        %v356 = vmul.f32 %v326, %v348
        %vm357 = vcmask 1046528
        %v358 = vsel %vm357, %v355, 0.0
        %v359 = vrot.slane %v358, 4
        %v360 = vadd.f32 %v358, %v359
        %v361 = vrot.slane %v360, 2
        %v362 = vadd.f32 %v360, %v361
        %v363 = vrot.slane %v362, 1
        %v364 = vadd.f32 %v362, %v363
        %v365 = vsel %vm357, %v356, 0.0
        %v366 = vrot.slane %v365, 4
        %v367 = vadd.f32 %v365, %v366
        %v368 = vrot.slane %v367, 2
        %v369 = vadd.f32 %v367, %v368
        %v370 = vrot.slane %v369, 1
        %v371 = vadd.f32 %v369, %v370
        %v372 = vadd.f32 %v313, %v364
        %v373 = vadd.f32 %v320, %v371
        %v374 = vmul.f32 %v372, 0.16666667
        %v375 = vmul.f32 %v373, 0.16666667
        %v376 = vmax.f32 %v374, 0.0
        %v377 = vmax.f32 %v375, 0.0
        %v378 = vsub.f32 0.0, %v376
        %v379 = vsub.f32 0.0, %v377
        %v380 = vmul.f32 %v378, 1.442695
        %v381 = vpow.pop %v380
        %v382 = vmul.f32 %v379, 1.442695
        %v383 = vpow.pop %v382
        %v384 = vsub.f32 %v353, %v334
        %v385 = vsub.f32 %v354, %v335
        %v386 = vadd.f32 %v384, 15.5
        %v387 = vadd.f32 %v385, 15.5
        %v388 = vmul.f32 %v386, 0.03125
        %v389 = vmul.f32 %v387, 0.03125
        %v390 = vfloor.f32 %v388
        %v391 = vfloor.f32 %v389
        %v392 = vmul.f32 %v390, 32.0
        %v393 = vmul.f32 %v391, 32.0
        %v394 = vsub.f32 %v384, %v392
        %v395 = vsub.f32 %v385, %v393
        %v396 = vand.u32 2147483647, %v390
        %v397 = vand.u32 2147483647, %v391
        %vm398 = vcmp.le.f32.partialorder %v396, 1.0
        %vm399 = vcmp.le.f32.partialorder %v397, 1.0
        %v400 = vand.u32 2147483647, %v394
        %v401 = vand.u32 2147483647, %v395
        %vm402 = vcmp.le.f32.partialorder %v400, 1.0
        %vm403 = vcmp.le.f32.partialorder %v401, 1.0
        %vm404 = vmand %vm398, %vm402
        %vm405 = vmand %vm399, %vm403
        %v406 = vsel %vm404, %v381, 0.0
        %v407 = vsel %vm405, %v383, 0.0
        %v408 = vperm.slane %v406, 4
        %v409 = vperm.slane %v407, 4
        %v410 = vmul.f32 %v408, %v353
        %v411 = vmul.f32 %v409, %v354
        %v414 = vrot.slane %v411, 4
        %v415 = vsel %vm253, %v410, %v414
        %v417 = vadd.f32 %v303, %v415
        %418 = vrot.lane.b32.xlu0 %v338, 1
        %v419 = vpop.permute.xlu0 %418
        %420 = vrot.lane.b32.xlu0 %v339, 1
        %v421 = vpop.permute.xlu0 %420
        %vm422 = vcmp.lt.s32.totalorder %v345, 1
        %v423 = vsel %vm422, %v419, %v421
        %v424 = vsel %vm422, %v421, %v419
        %425 = vrot.lane.b32.xlu0 %v381, 1
        %v426 = vpop.permute.xlu0 %425
        %427 = vrot.lane.b32.xlu0 %v383, 1
        %v428 = vpop.permute.xlu0 %427
        %v429 = vsel %vm422, %v426, %v428
        %v430 = vsel %vm422, %v428, %v426
        %v431 = vsub.f32 %v424, %v334
        %v432 = vsub.f32 %v423, %v335
        %v433 = vadd.f32 %v431, 15.5
        %v434 = vadd.f32 %v432, 15.5
        %v435 = vmul.f32 %v433, 0.03125
        %v436 = vmul.f32 %v434, 0.03125
        %v437 = vfloor.f32 %v435
        %v438 = vfloor.f32 %v436
        %v439 = vmul.f32 %v437, 32.0
        %v440 = vmul.f32 %v438, 32.0
        %v441 = vsub.f32 %v431, %v439
        %v442 = vsub.f32 %v432, %v440
        %v443 = vand.u32 2147483647, %v437
        %v444 = vand.u32 2147483647, %v438
        %vm445 = vcmp.le.f32.partialorder %v443, 1.0
        %vm446 = vcmp.le.f32.partialorder %v444, 1.0
        %v447 = vand.u32 2147483647, %v441
        %v448 = vand.u32 2147483647, %v442
        %vm449 = vcmp.le.f32.partialorder %v447, 1.0
        %vm450 = vcmp.le.f32.partialorder %v448, 1.0
        %vm451 = vmand %vm445, %vm449
        %vm452 = vmand %vm446, %vm450
        %v455 = vrot.slane %v430, 4
        %v456 = vrot.slane %v429, 4
        %v459 = vsel %vm451, %v455, 0.0
        %v460 = vsel %vm452, %v456, 0.0
        %v461 = vperm.slane %v459, 4
        %v462 = vperm.slane %v460, 4
        %v463 = vmul.f32 %v461, %v424
        %v464 = vmul.f32 %v462, %v423
        %v467 = vrot.slane %v464, 4
        %v468 = vsel %vm253, %v463, %v467
        %v470 = vadd.f32 %v417, %v468
        %471 = vrot.lane.b32.xlu0 %v321, 113
        %v472 = vpop.permute.xlu0 %471
        %473 = vrot.lane.b32.xlu0 %v322, 113
        %v474 = vpop.permute.xlu0 %473
        %vm475 = vcmp.lt.s32.totalorder %v345, 113
        %v476 = vsel %vm475, %v472, %v474
        %v477 = vsel %vm475, %v474, %v472
        %478 = vrot.lane.b32.xlu0 %v338, 113
        %v479 = vpop.permute.xlu0 %478
        %480 = vrot.lane.b32.xlu0 %v339, 113
        %v481 = vpop.permute.xlu0 %480
        %v482 = vsel %vm475, %v479, %v481
        %v483 = vsel %vm475, %v481, %v479
        %v484 = vmul.f32 %v325, %v476
        %v485 = vmul.f32 %v326, %v477
        %v486 = vsel %vm357, %v484, 0.0
        %v487 = vrot.slane %v486, 4
        %v488 = vadd.f32 %v486, %v487
        %v489 = vrot.slane %v488, 2
        %v490 = vadd.f32 %v488, %v489
        %v491 = vrot.slane %v490, 1
        %v492 = vadd.f32 %v490, %v491
        %v493 = vsel %vm357, %v485, 0.0
        %v494 = vrot.slane %v493, 4
        %v495 = vadd.f32 %v493, %v494
        %v496 = vrot.slane %v495, 2
        %v497 = vadd.f32 %v495, %v496
        %v498 = vrot.slane %v497, 1
        %v499 = vadd.f32 %v497, %v498
        %v500 = vadd.f32 %v313, %v492
        %v501 = vadd.f32 %v320, %v499
        %v502 = vmul.f32 %v500, 0.16666667
        %v503 = vmul.f32 %v501, 0.16666667
        %v504 = vmax.f32 %v502, 0.0
        %v505 = vmax.f32 %v503, 0.0
        %v506 = vsub.f32 0.0, %v504
        %v507 = vsub.f32 0.0, %v505
        %v508 = vmul.f32 %v506, 1.442695
        %v509 = vpow.pop %v508
        %v510 = vmul.f32 %v507, 1.442695
        %v511 = vpow.pop %v510
        %v512 = vsub.f32 %v482, %v334
        %v513 = vsub.f32 %v483, %v335
        %v514 = vadd.f32 %v512, 15.5
        %v515 = vadd.f32 %v513, 15.5
        %v516 = vmul.f32 %v514, 0.03125
        %v517 = vmul.f32 %v515, 0.03125
        %v518 = vfloor.f32 %v516
        %v519 = vfloor.f32 %v517
        %v520 = vmul.f32 %v518, 32.0
        %v521 = vmul.f32 %v519, 32.0
        %v522 = vsub.f32 %v512, %v520
        %v523 = vsub.f32 %v513, %v521
        %v524 = vand.u32 2147483647, %v518
        %v525 = vand.u32 2147483647, %v519
        %vm526 = vcmp.le.f32.partialorder %v524, 1.0
        %vm527 = vcmp.le.f32.partialorder %v525, 1.0
        %v528 = vand.u32 2147483647, %v522
        %v529 = vand.u32 2147483647, %v523
        %vm530 = vcmp.le.f32.partialorder %v528, 1.0
        %vm531 = vcmp.le.f32.partialorder %v529, 1.0
        %vm532 = vmand %vm526, %vm530
        %vm533 = vmand %vm527, %vm531
        %v534 = vsel %vm532, %v509, 0.0
        %v535 = vsel %vm533, %v511, 0.0
        %v536 = vperm.slane %v534, 4
        %v537 = vperm.slane %v535, 4
        %v538 = vmul.f32 %v536, %v482
        %v539 = vmul.f32 %v537, %v483
        %v542 = vrot.slane %v539, 4
        %v543 = vsel %vm253, %v538, %v542
        %v545 = vadd.f32 %v470, %v543
        %546 = vrot.lane.b32.xlu0 %v338, 15
        %v547 = vpop.permute.xlu0 %546
        %548 = vrot.lane.b32.xlu0 %v339, 15
        %v549 = vpop.permute.xlu0 %548
        %vm550 = vcmp.lt.s32.totalorder %v345, 15
        %v551 = vsel %vm550, %v547, %v549
        %v552 = vsel %vm550, %v549, %v547
        %553 = vrot.lane.b32.xlu0 %v509, 15
        %v554 = vpop.permute.xlu0 %553
        %555 = vrot.lane.b32.xlu0 %v511, 15
        %v556 = vpop.permute.xlu0 %555
        %v557 = vsel %vm550, %v554, %v556
        %v558 = vsel %vm550, %v556, %v554
        %v559 = vsub.f32 %v552, %v334
        %v560 = vsub.f32 %v551, %v335
        %v561 = vadd.f32 %v559, 15.5
        %v562 = vadd.f32 %v560, 15.5
        %v563 = vmul.f32 %v561, 0.03125
        %v564 = vmul.f32 %v562, 0.03125
        %v565 = vfloor.f32 %v563
        %v566 = vfloor.f32 %v564
        %v567 = vmul.f32 %v565, 32.0
        %v568 = vmul.f32 %v566, 32.0
        %v569 = vsub.f32 %v559, %v567
        %v570 = vsub.f32 %v560, %v568
        %v571 = vand.u32 2147483647, %v565
        %v572 = vand.u32 2147483647, %v566
        %vm573 = vcmp.le.f32.partialorder %v571, 1.0
        %vm574 = vcmp.le.f32.partialorder %v572, 1.0
        %v575 = vand.u32 2147483647, %v569
        %v576 = vand.u32 2147483647, %v570
        %vm577 = vcmp.le.f32.partialorder %v575, 1.0
        %vm578 = vcmp.le.f32.partialorder %v576, 1.0
        %vm579 = vmand %vm573, %vm577
        %vm580 = vmand %vm574, %vm578
        %v583 = vrot.slane %v558, 4
        %v584 = vrot.slane %v557, 4
        %v587 = vsel %vm579, %v583, 0.0
        %v588 = vsel %vm580, %v584, 0.0
        %v589 = vperm.slane %v587, 4
        %v590 = vperm.slane %v588, 4
        %v591 = vmul.f32 %v589, %v552
        %v592 = vmul.f32 %v590, %v551
        %v595 = vrot.slane %v592, 4
        %v596 = vsel %vm253, %v591, %v595
        %v598 = vadd.f32 %v545, %v596
        %599 = vrot.lane.b32.xlu0 %v321, 112
        %v600 = vpop.permute.xlu0 %599
        %601 = vrot.lane.b32.xlu0 %v322, 112
        %v602 = vpop.permute.xlu0 %601
        %vm603 = vcmp.lt.s32.totalorder %v345, 112
        %v604 = vsel %vm603, %v600, %v602
        %v605 = vsel %vm603, %v602, %v600
        %606 = vrot.lane.b32.xlu0 %v338, 112
        %v607 = vpop.permute.xlu0 %606
        %608 = vrot.lane.b32.xlu0 %v339, 112
        %v609 = vpop.permute.xlu0 %608
        %v610 = vsel %vm603, %v607, %v609
        %v611 = vsel %vm603, %v609, %v607
        %v612 = vmul.f32 %v325, %v604
        %v613 = vmul.f32 %v326, %v605
        %v614 = vsel %vm357, %v612, 0.0
        %v615 = vrot.slane %v614, 4
        %v616 = vadd.f32 %v614, %v615
        %v617 = vrot.slane %v616, 2
        %v618 = vadd.f32 %v616, %v617
        %v619 = vrot.slane %v618, 1
        %v620 = vadd.f32 %v618, %v619
        %v621 = vsel %vm357, %v613, 0.0
        %v622 = vrot.slane %v621, 4
        %v623 = vadd.f32 %v621, %v622
        %v624 = vrot.slane %v623, 2
        %v625 = vadd.f32 %v623, %v624
        %v626 = vrot.slane %v625, 1
        %v627 = vadd.f32 %v625, %v626
        %v628 = vadd.f32 %v313, %v620
        %v629 = vadd.f32 %v320, %v627
        %v630 = vmul.f32 %v628, 0.16666667
        %v631 = vmul.f32 %v629, 0.16666667
        %v632 = vmax.f32 %v630, 0.0
        %v633 = vmax.f32 %v631, 0.0
        %v634 = vsub.f32 0.0, %v632
        %v635 = vsub.f32 0.0, %v633
        %v636 = vmul.f32 %v634, 1.442695
        %v637 = vpow.pop %v636
        %v638 = vmul.f32 %v635, 1.442695
        %v639 = vpow.pop %v638
        %v640 = vsub.f32 %v610, %v334
        %v641 = vsub.f32 %v611, %v335
        %v642 = vadd.f32 %v640, 15.5
        %v643 = vadd.f32 %v641, 15.5
        %v644 = vmul.f32 %v642, 0.03125
        %v645 = vmul.f32 %v643, 0.03125
        %v646 = vfloor.f32 %v644
        %v647 = vfloor.f32 %v645
        %v648 = vmul.f32 %v646, 32.0
        %v649 = vmul.f32 %v647, 32.0
        %v650 = vsub.f32 %v640, %v648
        %v651 = vsub.f32 %v641, %v649
        %v652 = vand.u32 2147483647, %v646
        %v653 = vand.u32 2147483647, %v647
        %vm654 = vcmp.le.f32.partialorder %v652, 1.0
        %vm655 = vcmp.le.f32.partialorder %v653, 1.0
        %v656 = vand.u32 2147483647, %v650
        %v657 = vand.u32 2147483647, %v651
        %vm658 = vcmp.le.f32.partialorder %v656, 1.0
        %vm659 = vcmp.le.f32.partialorder %v657, 1.0
        %vm660 = vmand %vm654, %vm658
        %vm661 = vmand %vm655, %vm659
        %v662 = vsel %vm660, %v637, 0.0
        %v663 = vsel %vm661, %v639, 0.0
        %v664 = vperm.slane %v662, 4
        %v665 = vperm.slane %v663, 4
        %v666 = vmul.f32 %v664, %v610
        %v667 = vmul.f32 %v665, %v611
        %v670 = vrot.slane %v667, 4
        %v671 = vsel %vm253, %v666, %v670
        %v673 = vadd.f32 %v598, %v671
        %674 = vrot.lane.b32.xlu0 %v338, 16
        %v675 = vpop.permute.xlu0 %674
        %676 = vrot.lane.b32.xlu0 %v339, 16
        %v677 = vpop.permute.xlu0 %676
        %vm678 = vcmp.lt.s32.totalorder %v345, 16
        %v679 = vsel %vm678, %v675, %v677
        %v680 = vsel %vm678, %v677, %v675
        %681 = vrot.lane.b32.xlu0 %v637, 16
        %v682 = vpop.permute.xlu0 %681
        %683 = vrot.lane.b32.xlu0 %v639, 16
        %v684 = vpop.permute.xlu0 %683
        %v685 = vsel %vm678, %v682, %v684
        %v686 = vsel %vm678, %v684, %v682
        %v687 = vsub.f32 %v680, %v334
        %v688 = vsub.f32 %v679, %v335
        %v689 = vadd.f32 %v687, 15.5
        %v690 = vadd.f32 %v688, 15.5
        %v691 = vmul.f32 %v689, 0.03125
        %v692 = vmul.f32 %v690, 0.03125
        %v693 = vfloor.f32 %v691
        %v694 = vfloor.f32 %v692
        %v695 = vmul.f32 %v693, 32.0
        %v696 = vmul.f32 %v694, 32.0
        %v697 = vsub.f32 %v687, %v695
        %v698 = vsub.f32 %v688, %v696
        %v699 = vand.u32 2147483647, %v693
        %v700 = vand.u32 2147483647, %v694
        %vm701 = vcmp.le.f32.partialorder %v699, 1.0
        %vm702 = vcmp.le.f32.partialorder %v700, 1.0
        %v703 = vand.u32 2147483647, %v697
        %v704 = vand.u32 2147483647, %v698
        %vm705 = vcmp.le.f32.partialorder %v703, 1.0
        %vm706 = vcmp.le.f32.partialorder %v704, 1.0
        %vm707 = vmand %vm701, %vm705
        %vm708 = vmand %vm702, %vm706
        %v711 = vrot.slane %v686, 4
        %v712 = vrot.slane %v685, 4
        %v715 = vsel %vm707, %v711, 0.0
        %v716 = vsel %vm708, %v712, 0.0
        %v717 = vperm.slane %v715, 4
        %v718 = vperm.slane %v716, 4
        %v719 = vmul.f32 %v717, %v680
        %v720 = vmul.f32 %v718, %v679
        %v723 = vrot.slane %v720, 4
        %v724 = vsel %vm253, %v719, %v723
        %v726 = vadd.f32 %v673, %v724
        %727 = vrot.lane.b32.xlu0 %v321, 111
        %v728 = vpop.permute.xlu0 %727
        %729 = vrot.lane.b32.xlu0 %v322, 111
        %v730 = vpop.permute.xlu0 %729
        %vm731 = vcmp.lt.s32.totalorder %v345, 111
        %v732 = vsel %vm731, %v728, %v730
        %v733 = vsel %vm731, %v730, %v728
        %734 = vrot.lane.b32.xlu0 %v338, 111
        %v735 = vpop.permute.xlu0 %734
        %736 = vrot.lane.b32.xlu0 %v339, 111
        %v737 = vpop.permute.xlu0 %736
        %v738 = vsel %vm731, %v735, %v737
        %v739 = vsel %vm731, %v737, %v735
        %v740 = vmul.f32 %v325, %v732
        %v741 = vmul.f32 %v326, %v733
        %v742 = vsel %vm357, %v740, 0.0
        %v743 = vrot.slane %v742, 4
        %v744 = vadd.f32 %v742, %v743
        %v745 = vrot.slane %v744, 2
        %v746 = vadd.f32 %v744, %v745
        %v747 = vrot.slane %v746, 1
        %v748 = vadd.f32 %v746, %v747
        %v749 = vsel %vm357, %v741, 0.0
        %v750 = vrot.slane %v749, 4
        %v751 = vadd.f32 %v749, %v750
        %v752 = vrot.slane %v751, 2
        %v753 = vadd.f32 %v751, %v752
        %v754 = vrot.slane %v753, 1
        %v755 = vadd.f32 %v753, %v754
        %v756 = vadd.f32 %v313, %v748
        %v757 = vadd.f32 %v320, %v755
        %v758 = vmul.f32 %v756, 0.16666667
        %v759 = vmul.f32 %v757, 0.16666667
        %v760 = vmax.f32 %v758, 0.0
        %v761 = vmax.f32 %v759, 0.0
        %v762 = vsub.f32 0.0, %v760
        %v763 = vsub.f32 0.0, %v761
        %v764 = vmul.f32 %v762, 1.442695
        %v765 = vpow.pop %v764
        %v766 = vmul.f32 %v763, 1.442695
        %v767 = vpow.pop %v766
        %v768 = vsub.f32 %v738, %v334
        %v769 = vsub.f32 %v739, %v335
        %v770 = vadd.f32 %v768, 15.5
        %v771 = vadd.f32 %v769, 15.5
        %v772 = vmul.f32 %v770, 0.03125
        %v773 = vmul.f32 %v771, 0.03125
        %v774 = vfloor.f32 %v772
        %v775 = vfloor.f32 %v773
        %v776 = vmul.f32 %v774, 32.0
        %v777 = vmul.f32 %v775, 32.0
        %v778 = vsub.f32 %v768, %v776
        %v779 = vsub.f32 %v769, %v777
        %v780 = vand.u32 2147483647, %v774
        %v781 = vand.u32 2147483647, %v775
        %vm782 = vcmp.le.f32.partialorder %v780, 1.0
        %vm783 = vcmp.le.f32.partialorder %v781, 1.0
        %v784 = vand.u32 2147483647, %v778
        %v785 = vand.u32 2147483647, %v779
        %vm786 = vcmp.le.f32.partialorder %v784, 1.0
        %vm787 = vcmp.le.f32.partialorder %v785, 1.0
        %vm788 = vmand %vm782, %vm786
        %vm789 = vmand %vm783, %vm787
        %v790 = vsel %vm788, %v765, 0.0
        %v791 = vsel %vm789, %v767, 0.0
        %v792 = vperm.slane %v790, 4
        %v793 = vperm.slane %v791, 4
        %v794 = vmul.f32 %v792, %v738
        %v795 = vmul.f32 %v793, %v739
        %v798 = vrot.slane %v795, 4
        %v799 = vsel %vm253, %v794, %v798
        %v801 = vadd.f32 %v726, %v799
        %802 = vrot.lane.b32.xlu0 %v338, 17
        %v803 = vpop.permute.xlu0 %802
        %804 = vrot.lane.b32.xlu0 %v339, 17
        %v805 = vpop.permute.xlu0 %804
        %vm806 = vcmp.lt.s32.totalorder %v345, 17
        %v807 = vsel %vm806, %v803, %v805
        %v808 = vsel %vm806, %v805, %v803
        %809 = vrot.lane.b32.xlu0 %v765, 17
        %v810 = vpop.permute.xlu0 %809
        %811 = vrot.lane.b32.xlu0 %v767, 17
        %v812 = vpop.permute.xlu0 %811
        %v813 = vsel %vm806, %v810, %v812
        %v814 = vsel %vm806, %v812, %v810
        %v815 = vsub.f32 %v808, %v334
        %v816 = vsub.f32 %v807, %v335
        %v817 = vadd.f32 %v815, 15.5
        %v818 = vadd.f32 %v816, 15.5
        %v819 = vmul.f32 %v817, 0.03125
        %v820 = vmul.f32 %v818, 0.03125
        %v821 = vfloor.f32 %v819
        %v822 = vfloor.f32 %v820
        %v823 = vmul.f32 %v821, 32.0
        %v824 = vmul.f32 %v822, 32.0
        %v825 = vsub.f32 %v815, %v823
        %v826 = vsub.f32 %v816, %v824
        %v827 = vand.u32 2147483647, %v821
        %v828 = vand.u32 2147483647, %v822
        %vm829 = vcmp.le.f32.partialorder %v827, 1.0
        %vm830 = vcmp.le.f32.partialorder %v828, 1.0
        %v831 = vand.u32 2147483647, %v825
        %v832 = vand.u32 2147483647, %v826
        %vm833 = vcmp.le.f32.partialorder %v831, 1.0
        %vm834 = vcmp.le.f32.partialorder %v832, 1.0
        %vm835 = vmand %vm829, %vm833
        %vm836 = vmand %vm830, %vm834
        %v839 = vrot.slane %v814, 4
        %v840 = vrot.slane %v813, 4
        %v843 = vsel %vm835, %v839, 0.0
        %v844 = vsel %vm836, %v840, 0.0
        %v845 = vperm.slane %v843, 4
        %v846 = vperm.slane %v844, 4
        %v847 = vmul.f32 %v845, %v808
        %v848 = vmul.f32 %v846, %v807
        %v851 = vrot.slane %v848, 4
        %v852 = vsel %vm253, %v847, %v851
        %v854 = vadd.f32 %v801, %v852
        %v855 = vld [vmem:[%s3] sm:$0xf]
        %v856 = vld [vmem:[%s4] sm:$0xf]
        %858 = vset.pattern.permute.xlu0 0
        %859 = vperm.xlu0 %858, %v856
        %v860 = vpop.permute.xlu0 %859
        %863 = vst [vmem:[#allocation1] ss:$2 sm:$0xff] %v854
        %v864 = vld.sshfl [vmem:[#allocation1] sm:$0xff pattern:$0x75316420]
        %v865 = vld.sshfl [vmem:[#allocation1 + $0x8] sm:$0xff pattern:$0x75316420]
        %vm866 = vcmask 31744
        %v868 = vsel %vm866, %v855, 0
        %v870 = vsel %vm253, %v864, 0
        %v872 = vsel %vm253, %v865, 0
        %874 = vmatpush.msra.mxu0 0.0
        %875 = vmatpush.msra.mxu0 0.0
        %876 = vmatpush.msra.mxu0 0.0
        %877 = vmatpush.msra.mxu0 0.0
        %878 = vmatpush.msra.mxu0 0.0
        %879 = vmatpush.msra.mxu0 0.0
        %880 = vmatpush.msra.mxu0 0.0
        %881 = vmatpush.msra.mxu0 0.0
        %882 = vmatpush.msra.mxu0 0.0
        %883 = vmatpush.msra.mxu0 0.0
        %884 = vmatpush.msra.mxu0 0.0
        %885 = vmatpush.msra.mxu0 0.0
        %886 = vmatpush.msra.mxu0 0.0
        %887 = vmatpush.msra.mxu0 0.0
        %888 = vmatpush.msra.mxu0 0.0
        %889 = vmatpush.msra.mxu0 %v870
        %890 = vmatmul.f32.gmra.mxu0 %v868
        %v891 = vpop.f32.mrf.mxu0
        %v892 = vadd.f32 %v860, %v891
        %893 = vdwg.mxu0
        %894 = vmatpush.msra.mxu0 0.0
        %895 = vmatpush.msra.mxu0 0.0
        %896 = vmatpush.msra.mxu0 0.0
        %897 = vmatpush.msra.mxu0 0.0
        %898 = vmatpush.msra.mxu0 0.0
        %899 = vmatpush.msra.mxu0 0.0
        %900 = vmatpush.msra.mxu0 0.0
        %901 = vmatpush.msra.mxu0 0.0
        %902 = vmatpush.msra.mxu0 0.0
        %903 = vmatpush.msra.mxu0 0.0
        %904 = vmatpush.msra.mxu0 0.0
        %905 = vmatpush.msra.mxu0 0.0
        %906 = vmatpush.msra.mxu0 0.0
        %907 = vmatpush.msra.mxu0 0.0
        %908 = vmatpush.msra.mxu0 0.0
        %909 = vmatpush.msra.mxu0 %v872
        %910 = vmatmul.f32.gmra.mxu0 %v868
        %v911 = vpop.f32.mrf.mxu0
        %v912 = vadd.f32 %v860, %v911
        %913 = vdwg.mxu0
        %v916 = vrot.slane %v912, 4
        %v917 = vsel %vm253, %v892, %v916
        %v919 = vsub.f32 %v245, %v917
        %920 = vst [vmem:[%s232] sm:$0xff] %v919
        %s921 = sand.u32 %s142, 1
        %s922 = scalar_lea.sflag [#allocation3], %s921
        %s923 = sand.u32 %s142, 1
        %s924 = smul.addr %s923, 8
        %s925 = scalar_lea.vmem [#allocation2], %s924
        // Predicated region
        $region41: #{tpu_custom_call.1} parent=39 // pred_check
          %p926 = pneg %p152
        $region42: #{tpu_custom_call.1} parent=39 // pred_check_branch
          %928 = sbr.rel (%p926) target = $region44
        $region43: #{tpu_custom_call.1} parent=39 // pred_region
          %930 = vsyncadd %s922, 0
          %s931 = smul.addr %s19, 2
          %s932 = smul.addr %s931, 4
          %s933 = scalar_lea.hbm %s5, %s932
          %s935 = sshll.u32 %s925, 4
          %s936 = int_to_ptr.vmem [resolvable:$true] %s935
          %s937 = sshll.u32 %s933, 4
          %s938 = int_to_ptr.hbm [resolvable:$true] %s937
          %940 = dma.vmem_to_hbm [thread:$0]  %s936, 128, %s938, %s922
        $region44: #{tpu_custom_call.1} parent=39 // pred_fallthru
          _
      $region40: #{tpu_custom_call.1} parent=5 // pred_fallthru
        _
      %p941 = scmp.le.s32.totalorder 2, %s14
      // Predicated region
      $region45: #{tpu_custom_call.1} parent=5 // pred_check
        %p942 = pneg %p941
      $region46: #{tpu_custom_call.1} parent=5 // pred_check_branch
        %944 = sbr.rel (%p942) target = $region48
      $region47: #{tpu_custom_call.1} parent=5 // pred_region
        %s945 = ssub.s32 %s14, 2
        // Predicated region
        $region49: #{tpu_custom_call.1} parent=47 // pred_check
          %p946 = pneg %p158
        $region50: #{tpu_custom_call.1} parent=47 // pred_check_branch
          %948 = sbr.rel (%p946) target = $region52
        $region51: #{tpu_custom_call.1} parent=47 // pred_region
          %s949 = sand.u32 %s143, 1
          %s950 = scalar_lea.sflag [#allocation3], %s949
          %s951 = sand.u32 %s143, 1
          %s952 = smul.addr %s951, 8
          %s953 = scalar_lea.vmem [#allocation2], %s952
          %955 = dma.done %s950, 128
        $region52: #{tpu_custom_call.1} parent=47 // pred_fallthru
          _
      $region48: #{tpu_custom_call.1} parent=5 // pred_fallthru
        _
    $region6: #{tpu_custom_call.1} parent=1 // loop_footer
      %s18 = sadd.s32 1, %s14
    $region7: #{tpu_custom_call.1} parent=1 // loop_footer_branch
      %13 = sbr.rel target = $region3
    $region8: #{tpu_custom_call.1} parent=1 // loop_exit
      _
    %956 = vsyncpa [#allocation3], 1
    %s957 = scalar_lea.sflag [#allocation3], 1
    %958 = vsyncpa %s957, 1

</llo_original>
